<compile_context>
chip_gen: v5e
topology: v5e:2x2
jax: 0.10.0
libtpu: 0.0.40
codegen_flags: <defaults>
</compile_context>

<pallas_src>
import jax
import jax.numpy as jnp
from jax.experimental import pallas as pl
from jax.experimental.pallas import tpu as pltpu


# ---------------------------------------------------------------------------
# Kernel
# ---------------------------------------------------------------------------
def _image_only_classifier_kernel(
    x_ref,                       # [TILE_B, Dp]  f32 or bf16 (cast to bf16 in-kernel)
    wp_ref, bp_ref,              # image_proj   (BN1 folded in)
    w1_ref, b1_ref,              # Linear(H -> 2H)   (BN2 folded in)
    w2_ref, b2_ref,              # Linear(2H -> 2H)  (BN3 folded in)
    w3_ref, b3_ref,              # Linear(2H -> H)   (BN4 folded in)
    w4_ref, b4_ref,              # Linear(H -> C) classifier head
    out_ref,                     # [TILE_B, Cp] bf16
):
    f32 = jnp.float32
    bf16 = jnp.bfloat16

    # bf16 cast rides the VPU slot (slack under the MXU-bound body); MXU accumulates in f32.
    x = x_ref[...].astype(bf16)
    h = jnp.dot(x, wp_ref[...], preferred_element_type=f32) + bp_ref[...]
    h = jnp.maximum(h, 0.0)

    h = jnp.dot(h.astype(bf16), w1_ref[...], preferred_element_type=f32) + b1_ref[...]
    h = jnp.maximum(h, 0.0)

    h = jnp.dot(h.astype(bf16), w2_ref[...], preferred_element_type=f32) + b2_ref[...]
    h = jnp.maximum(h, 0.0)

    h = jnp.dot(h.astype(bf16), w3_ref[...], preferred_element_type=f32) + b3_ref[...]
    h = jnp.maximum(h, 0.0)

    # Head also runs bf16-in / f32-acc; keep head f32 if logit-level fidelity matters.
    logits = jnp.dot(h.astype(bf16), w4_ref[...], preferred_element_type=f32) + b4_ref[...]
    out_ref[...] = logits.astype(out_ref.dtype)


# ---------------------------------------------------------------------------
# Parameter prep: BN fold + lane padding + bf16 cast
# ---------------------------------------------------------------------------
def _round_up(x, m):
    return (x + m - 1) // m * m


def _fold_bn_into_linear(w, b, gamma, beta, rmean, rvar, eps=1e-5):
    """Fold eval-mode BatchNorm1d (running stats) into the preceding Linear (exact in f32)."""
    scale = gamma / jnp.sqrt(rvar + eps)          # [dout]
    shift = beta - rmean * scale                  # [dout]
    w_f = w * scale[None, :]                      # [din, dout]
    b_f = b * scale[None, :] + shift[None, :]     # [1, dout]
    return w_f, b_f


def fold_params(linears, bns):
    """Fold each BatchNorm into its preceding Linear; head Linear has no BN."""
    folded = []
    for idx, (w, b) in enumerate(linears):
        if idx < len(bns):
            gamma, beta, rmean, rvar = bns[idx]
            w, b = _fold_bn_into_linear(w, b, gamma, beta, rmean, rvar)
        folded.append((w.astype(jnp.float32), b.astype(jnp.float32)))
    return folded


def _pad2(a, rows, cols):
    return jnp.pad(a, ((0, rows - a.shape[0]), (0, cols - a.shape[1])))


def prepare_params(folded, lane=128):
    """Zero-pad every feature dim to a multiple of 128 lanes; weights -> bf16, biases -> f32."""
    padded = []
    for w, b in folded:
        din_p = _round_up(w.shape[0], lane)
        dout_p = _round_up(w.shape[1], lane)
        w_p = _pad2(w, din_p, dout_p).astype(jnp.bfloat16)
        b_p = _pad2(b, 1, dout_p).astype(jnp.float32)
        padded.append((w_p, b_p))
    return padded


def _vmem_capacity_bytes(default=64 * 2**20):
    """Per-TensorCore VMEM capacity (conservative fallback if query unavailable)."""
    try:
        return int(pltpu.get_tpu_info().vmem_capacity_bytes)
    except Exception:
        return default


# ---------------------------------------------------------------------------
# Wrapper
# ---------------------------------------------------------------------------
def image_only_classifier(image_emb, padded_params, num_classes):
    batch, image_dim = image_emb.shape
    (wp, bp), (w1, b1), (w2, b2), (w3, b3), (w4, b4) = padded_params
    dp = wp.shape[0]            # padded image_dim
    cp = w4.shape[1]            # padded num_classes

    vmem_cap = _vmem_capacity_bytes()

    # --- Batch tiling -------------------------------------------------------
    # Pick the number of tiles first (minimizes tail padding), then round the tile to a
    # sublane multiple.  Larger (<=512 row) tiles when VMEM is plentiful (v5e/v6e 128MiB)
    # amortize the ~0.35us per-grid-step overhead; on v7x (64MiB) cap at 256 and prefer an
    # even tile count so both TensorCores get work under dimension_semantics=("parallel",).
    b8 = _round_up(max(batch, 1), 8)
    tile_cap = 512 if vmem_cap >= 100 * 2**20 else 256
    num_tiles = max(pl.cdiv(b8, tile_cap), 1)
    if b8 >= 16:
        num_tiles = max(num_tiles, 2)           # give both v7x TCs work
        if num_tiles % 2:
            num_tiles += 1                      # prefer an even split across 2 TCs
    tile_b = _round_up(pl.cdiv(b8, num_tiles), 8)
    b_pad = num_tiles * tile_b

    # --- Input: avoid wrapper-side HBM round-trips when possible ------------
    # Only materialize a padded copy when unavoidable; otherwise the f32/bf16 input goes
    # straight into pallas_call and the kernel does the bf16 cast.
    if (b_pad != batch) or (dp != image_dim):
        x = jnp.pad(image_emb.astype(jnp.bfloat16),
                    ((0, b_pad - batch), (0, dp - image_dim)))
    else:
        x = image_emb

    weight_args = (wp, bp, w1, b1, w2, b2, w3, b3, w4, b4)

    x_spec = pl.BlockSpec((tile_b, dp), lambda i: (i, 0))
    out_spec = pl.BlockSpec((tile_b, cp), lambda i: (i, 0))
    # Constant block index -> weights/biases stay VMEM-resident across grid steps;
    # Buffered(1) drops the default second pipeline buffer (halves weight VMEM footprint).
    const_spec = lambda a: pl.BlockSpec(a.shape, lambda i: (0, 0),
                                        pipeline_mode=pl.Buffered(1))
    in_specs = [x_spec] + [const_spec(a) for a in weight_args]

    # Advisory cost estimate for XLA scheduling.
    flops = 2 * b_pad * sum(int(w.shape[0]) * int(w.shape[1]) for w in (wp, w1, w2, w3, w4))
    bytes_accessed = (
        int(x.size) * x.dtype.itemsize
        + sum(int(a.size) * a.dtype.itemsize for a in weight_args)
        + b_pad * cp * 2                                    # bf16 logits writeback
    )
    cost = pl.CostEstimate(flops=flops, transcendentals=0, bytes_accessed=bytes_accessed)

    # --- Exact VMEM budget ---------------------------------------------------
    # single-buffered resident weights + double-buffered x/out tiles + f32 intermediates
    # (+ bf16 cast copies) + headroom; capped per generation (leave 25% of VMEM free).
    weight_bytes = sum(int(a.size) * a.dtype.itemsize for a in weight_args)   # Buffered(1)
    x_tile_bytes = 2 * tile_b * dp * x.dtype.itemsize
    out_tile_bytes = 2 * tile_b * cp * 2
    widest = max(int(w1.shape[1]), int(w2.shape[1]))
    act_bytes = 6 * tile_b * widest * 4
    budget = weight_bytes + x_tile_bytes + out_tile_bytes + act_bytes + 4 * 2**20
    vmem_bytes = int(min(max(budget, 16 * 2**20), int(0.75 * vmem_cap)))

    out = pl.pallas_call(
        _image_only_classifier_kernel,
        out_shape=jax.ShapeDtypeStruct((b_pad, cp), jnp.bfloat16),
        grid=(num_tiles,),
        in_specs=in_specs,
        out_specs=out_spec,
        compiler_params=pltpu.CompilerParams(
            dimension_semantics=("parallel",),
            vmem_limit_bytes=vmem_bytes,
        ),
        cost_estimate=cost,
    )(x, *weight_args)

    # Tiny slice+cast outside the kernel; HBM writeback from the kernel stays bf16.
    return out[:batch, :num_classes].astype(jnp.float32)


# ---------------------------------------------------------------------------
# Synthetic parameters (shapes match the PyTorch module)
# ---------------------------------------------------------------------------
def init_params(key, image_dim, hidden_dim, num_classes):
    dims = [
        (image_dim, hidden_dim),           # image_proj
        (hidden_dim, hidden_dim * 2),      # Linear 1
        (hidden_dim * 2, hidden_dim * 2),  # Linear 2
        (hidden_dim * 2, hidden_dim),      # Linear 3
        (hidden_dim, num_classes),         # Linear 4 (head)
    ]
    bn_dims = [hidden_dim, hidden_dim * 2, hidden_dim * 2, hidden_dim]

    keys = jax.random.split(key, 2 * len(dims) + 4 * len(bn_dims))
    ki = iter(range(len(keys)))

    linears = []
    for (din, dout) in dims:
        w = jax.random.normal(keys[next(ki)], (din, dout), jnp.float32) * (1.0 / jnp.sqrt(din))
        b = jax.random.normal(keys[next(ki)], (1, dout), jnp.float32) * 0.01
        linears.append((w, b))

    bns = []
    for d in bn_dims:
        gamma = jax.random.uniform(keys[next(ki)], (d,), jnp.float32, 0.5, 1.5)
        beta = jax.random.normal(keys[next(ki)], (d,), jnp.float32) * 0.1
        rmean = jax.random.normal(keys[next(ki)], (d,), jnp.float32) * 0.1
        rvar = jax.random.uniform(keys[next(ki)], (d,), jnp.float32, 0.5, 1.5)
        bns.append((gamma, beta, rmean, rvar))

    return linears, bns


# ---------------------------------------------------------------------------
# References
# ---------------------------------------------------------------------------
def reference_matched(image_emb, folded):
    """Same math as the kernel (BN-folded, bf16 matmul inputs, f32 accumulation, bf16 logits)."""
    h = image_emb.astype(jnp.bfloat16)
    n = len(folded)
    for idx, (w, b) in enumerate(folded):
        h = jnp.dot(h, w.astype(jnp.bfloat16), preferred_element_type=jnp.float32) + b
        if idx < n - 1:
            h = jnp.maximum(h, 0.0).astype(jnp.bfloat16)
    return h.astype(jnp.bfloat16).astype(jnp.float32)


def reference_module_f32(image_emb, linears, bns, eps=1e-5):
    """Original module semantics (eval mode) in pure float32."""
    h = image_emb
    for idx, (w, b) in enumerate(linears):
        h = h @ w + b
        if idx < len(bns):
            gamma, beta, rmean, rvar = bns[idx]
            h = (h - rmean) / jnp.sqrt(rvar + eps) * gamma + beta
            h = jnp.maximum(h, 0.0)
    return h


# ---------------------------------------------------------------------------
if __name__ == "__main__":
    BATCH, IMAGE_DIM, HIDDEN_DIM, NUM_CLASSES = 8, 64, 32, 3

    key = jax.random.PRNGKey(0)
    k_x, k_p = jax.random.split(key)

    image_emb = jax.random.normal(k_x, (BATCH, IMAGE_DIM), jnp.float32)
    linears, bns = init_params(k_p, IMAGE_DIM, HIDDEN_DIM, NUM_CLASSES)

    folded = fold_params(linears, bns)
    padded_params = prepare_params(folded)

    logits = image_only_classifier(image_emb, padded_params, NUM_CLASSES)
    logits = jax.block_until_ready(logits)
    assert logits.shape == (BATCH, NUM_CLASSES), logits.shape

    # Tight check: kernel vs. an XLA reference running identical bf16/f32 math (incl. bf16 logits).
    ref_bf16 = reference_matched(image_emb, folded)
    assert jnp.allclose(logits, ref_bf16, rtol=2e-2, atol=2e-2), \
        "mismatch vs matched-precision reference"

    # Semantic check: kernel vs. the original module's float32 eval-mode forward
    # (loose tolerance accounts for bf16 weights/activations/logits).
    ref_f32 = reference_module_f32(image_emb, linears, bns)
    assert jnp.allclose(logits, ref_f32, rtol=7.5e-2, atol=7.5e-2), \
        "mismatch vs f32 module reference"

    print("KERNEL_OK")
</pallas_src>

<mosaic_0001>
module attributes {stable_mosaic.version = 11 : i64} {
  func.func @_image_only_classifier_kernel(%arg0: i32, %arg1: memref<8x128xbf16, #tpu.memory_space<vmem>>, %arg2: memref<128x128xbf16, #tpu.memory_space<vmem>>, %arg3: memref<1x128xf32, #tpu.memory_space<vmem>>, %arg4: memref<128x128xbf16, #tpu.memory_space<vmem>>, %arg5: memref<1x128xf32, #tpu.memory_space<vmem>>, %arg6: memref<128x128xbf16, #tpu.memory_space<vmem>>, %arg7: memref<1x128xf32, #tpu.memory_space<vmem>>, %arg8: memref<128x128xbf16, #tpu.memory_space<vmem>>, %arg9: memref<1x128xf32, #tpu.memory_space<vmem>>, %arg10: memref<128x128xbf16, #tpu.memory_space<vmem>>, %arg11: memref<1x128xf32, #tpu.memory_space<vmem>>, %arg12: memref<8x128xbf16, #tpu.memory_space<vmem>>) attributes {dimension_semantics = [#tpu.dimension_semantics<parallel>], iteration_bounds = array<i64: 1>, scalar_prefetch = 0 : i64, scratch_operands = 0 : i64, tpu.core_type = #tpu.core_type<tc>, window_params = [{transform_indices = @transform_0, window_bounds = array<i64: 8, 128>}, {pipeline_mode = #tpu.pipeline_mode<synchronous>, transform_indices = @transform_1, window_bounds = array<i64: 128, 128>}, {pipeline_mode = #tpu.pipeline_mode<synchronous>, transform_indices = @transform_2, window_bounds = array<i64: 1, 128>}, {pipeline_mode = #tpu.pipeline_mode<synchronous>, transform_indices = @transform_3, window_bounds = array<i64: 128, 128>}, {pipeline_mode = #tpu.pipeline_mode<synchronous>, transform_indices = @transform_4, window_bounds = array<i64: 1, 128>}, {pipeline_mode = #tpu.pipeline_mode<synchronous>, transform_indices = @transform_5, window_bounds = array<i64: 128, 128>}, {pipeline_mode = #tpu.pipeline_mode<synchronous>, transform_indices = @transform_6, window_bounds = array<i64: 1, 128>}, {pipeline_mode = #tpu.pipeline_mode<synchronous>, transform_indices = @transform_7, window_bounds = array<i64: 128, 128>}, {pipeline_mode = #tpu.pipeline_mode<synchronous>, transform_indices = @transform_8, window_bounds = array<i64: 1, 128>}, {pipeline_mode = #tpu.pipeline_mode<synchronous>, transform_indices = @transform_9, window_bounds = array<i64: 128, 128>}, {pipeline_mode = #tpu.pipeline_mode<synchronous>, transform_indices = @transform_10, window_bounds = array<i64: 1, 128>}, {transform_indices = @transform_11, window_bounds = array<i64: 8, 128>}]} {
    %c0 = arith.constant 0 : index
    %c0_0 = arith.constant 0 : index
    %0 = vector.load %arg1[%c0, %c0_0] : memref<8x128xbf16, #tpu.memory_space<vmem>>, vector<8x128xbf16>
    %c0_1 = arith.constant 0 : index
    %c0_2 = arith.constant 0 : index
    %1 = vector.load %arg2[%c0_1, %c0_2] : memref<128x128xbf16, #tpu.memory_space<vmem>>, vector<128x128xbf16>
    %cst = arith.constant dense<0.000000e+00> : vector<8x128xf32>
    %2 = tpu.matmul %0, %1, %cst {dimension_numbers = #tpu.dot_dimension_numbers<[1], [0], [0], [1], [0, 0, 1, 1], [], []>} : vector<8x128xbf16>, vector<128x128xbf16>, vector<8x128xf32> -> vector<8x128xf32>
    %c0_3 = arith.constant 0 : index
    %c0_4 = arith.constant 0 : index
    %3 = vector.load %arg3[%c0_3, %c0_4] : memref<1x128xf32, #tpu.memory_space<vmem>>, vector<1x128xf32>
    %4 = vector.broadcast %3 : vector<1x128xf32> to vector<8x128xf32>
    %5 = arith.addf %2, %4 : vector<8x128xf32>
    %cst_5 = arith.constant 0.000000e+00 : f32
    %6 = vector.broadcast %cst_5 : f32 to vector<8x128xf32>
    %7 = arith.maximumf %5, %6 : vector<8x128xf32>
    %8 = arith.truncf %7 : vector<8x128xf32> to vector<8x128xbf16>
    %c0_6 = arith.constant 0 : index
    %c0_7 = arith.constant 0 : index
    %9 = vector.load %arg4[%c0_6, %c0_7] : memref<128x128xbf16, #tpu.memory_space<vmem>>, vector<128x128xbf16>
    %cst_8 = arith.constant dense<0.000000e+00> : vector<8x128xf32>
    %10 = tpu.matmul %8, %9, %cst_8 {dimension_numbers = #tpu.dot_dimension_numbers<[1], [0], [0], [1], [0, 0, 1, 1], [], []>} : vector<8x128xbf16>, vector<128x128xbf16>, vector<8x128xf32> -> vector<8x128xf32>
    %c0_9 = arith.constant 0 : index
    %c0_10 = arith.constant 0 : index
    %11 = vector.load %arg5[%c0_9, %c0_10] : memref<1x128xf32, #tpu.memory_space<vmem>>, vector<1x128xf32>
    %12 = vector.broadcast %11 : vector<1x128xf32> to vector<8x128xf32>
    %13 = arith.addf %10, %12 : vector<8x128xf32>
    %cst_11 = arith.constant 0.000000e+00 : f32
    %14 = vector.broadcast %cst_11 : f32 to vector<8x128xf32>
    %15 = arith.maximumf %13, %14 : vector<8x128xf32>
    %16 = arith.truncf %15 : vector<8x128xf32> to vector<8x128xbf16>
    %c0_12 = arith.constant 0 : index
    %c0_13 = arith.constant 0 : index
    %17 = vector.load %arg6[%c0_12, %c0_13] : memref<128x128xbf16, #tpu.memory_space<vmem>>, vector<128x128xbf16>
    %cst_14 = arith.constant dense<0.000000e+00> : vector<8x128xf32>
    %18 = tpu.matmul %16, %17, %cst_14 {dimension_numbers = #tpu.dot_dimension_numbers<[1], [0], [0], [1], [0, 0, 1, 1], [], []>} : vector<8x128xbf16>, vector<128x128xbf16>, vector<8x128xf32> -> vector<8x128xf32>
    %c0_15 = arith.constant 0 : index
    %c0_16 = arith.constant 0 : index
    %19 = vector.load %arg7[%c0_15, %c0_16] : memref<1x128xf32, #tpu.memory_space<vmem>>, vector<1x128xf32>
    %20 = vector.broadcast %19 : vector<1x128xf32> to vector<8x128xf32>
    %21 = arith.addf %18, %20 : vector<8x128xf32>
    %cst_17 = arith.constant 0.000000e+00 : f32
    %22 = vector.broadcast %cst_17 : f32 to vector<8x128xf32>
    %23 = arith.maximumf %21, %22 : vector<8x128xf32>
    %24 = arith.truncf %23 : vector<8x128xf32> to vector<8x128xbf16>
    %c0_18 = arith.constant 0 : index
    %c0_19 = arith.constant 0 : index
    %25 = vector.load %arg8[%c0_18, %c0_19] : memref<128x128xbf16, #tpu.memory_space<vmem>>, vector<128x128xbf16>
    %cst_20 = arith.constant dense<0.000000e+00> : vector<8x128xf32>
    %26 = tpu.matmul %24, %25, %cst_20 {dimension_numbers = #tpu.dot_dimension_numbers<[1], [0], [0], [1], [0, 0, 1, 1], [], []>} : vector<8x128xbf16>, vector<128x128xbf16>, vector<8x128xf32> -> vector<8x128xf32>
    %c0_21 = arith.constant 0 : index
    %c0_22 = arith.constant 0 : index
    %27 = vector.load %arg9[%c0_21, %c0_22] : memref<1x128xf32, #tpu.memory_space<vmem>>, vector<1x128xf32>
    %28 = vector.broadcast %27 : vector<1x128xf32> to vector<8x128xf32>
    %29 = arith.addf %26, %28 : vector<8x128xf32>
    %cst_23 = arith.constant 0.000000e+00 : f32
    %30 = vector.broadcast %cst_23 : f32 to vector<8x128xf32>
    %31 = arith.maximumf %29, %30 : vector<8x128xf32>
    %32 = arith.truncf %31 : vector<8x128xf32> to vector<8x128xbf16>
    %c0_24 = arith.constant 0 : index
    %c0_25 = arith.constant 0 : index
    %33 = vector.load %arg10[%c0_24, %c0_25] : memref<128x128xbf16, #tpu.memory_space<vmem>>, vector<128x128xbf16>
    %cst_26 = arith.constant dense<0.000000e+00> : vector<8x128xf32>
    %34 = tpu.matmul %32, %33, %cst_26 {dimension_numbers = #tpu.dot_dimension_numbers<[1], [0], [0], [1], [0, 0, 1, 1], [], []>} : vector<8x128xbf16>, vector<128x128xbf16>, vector<8x128xf32> -> vector<8x128xf32>
    %c0_27 = arith.constant 0 : index
    %c0_28 = arith.constant 0 : index
    %35 = vector.load %arg11[%c0_27, %c0_28] : memref<1x128xf32, #tpu.memory_space<vmem>>, vector<1x128xf32>
    %36 = vector.broadcast %35 : vector<1x128xf32> to vector<8x128xf32>
    %37 = arith.addf %34, %36 : vector<8x128xf32>
    %38 = arith.truncf %37 : vector<8x128xf32> to vector<8x128xbf16>
    %c0_29 = arith.constant 0 : index
    %c0_30 = arith.constant 0 : index
    %39 = vector.load %arg12[%c0_29, %c0_30] : memref<8x128xbf16, #tpu.memory_space<vmem>>, vector<8x128xbf16>
    tpu.vector_store %arg12[%c0_29, %c0_30], %38 {strides = array<i32>} : memref<8x128xbf16, #tpu.memory_space<vmem>>, vector<8x128xbf16>,
    return
  }
  func.func @transform_0(%arg0: i32) -> (i32, i32) {
    %c0_i32 = arith.constant 0 : i32
    %c0_i32_0 = arith.constant 0 : i32
    return %arg0, %c0_i32 : i32, i32
  }
  func.func @transform_1(%arg0: i32) -> (i32, i32) {
    %c0_i32 = arith.constant 0 : i32
    %c0_i32_0 = arith.constant 0 : i32
    %c0_i32_1 = arith.constant 0 : i32
    return %c0_i32, %c0_i32_0 : i32, i32
  }
  func.func @transform_2(%arg0: i32) -> (i32, i32) {
    %c0_i32 = arith.constant 0 : i32
    %c0_i32_0 = arith.constant 0 : i32
    %c0_i32_1 = arith.constant 0 : i32
    return %c0_i32, %c0_i32_0 : i32, i32
  }
  func.func @transform_3(%arg0: i32) -> (i32, i32) {
    %c0_i32 = arith.constant 0 : i32
    %c0_i32_0 = arith.constant 0 : i32
    %c0_i32_1 = arith.constant 0 : i32
    return %c0_i32, %c0_i32_0 : i32, i32
  }
  func.func @transform_4(%arg0: i32) -> (i32, i32) {
    %c0_i32 = arith.constant 0 : i32
    %c0_i32_0 = arith.constant 0 : i32
    %c0_i32_1 = arith.constant 0 : i32
    return %c0_i32, %c0_i32_0 : i32, i32
  }
  func.func @transform_5(%arg0: i32) -> (i32, i32) {
    %c0_i32 = arith.constant 0 : i32
    %c0_i32_0 = arith.constant 0 : i32
    %c0_i32_1 = arith.constant 0 : i32
    return %c0_i32, %c0_i32_0 : i32, i32
  }
  func.func @transform_6(%arg0: i32) -> (i32, i32) {
    %c0_i32 = arith.constant 0 : i32
    %c0_i32_0 = arith.constant 0 : i32
    %c0_i32_1 = arith.constant 0 : i32
    return %c0_i32, %c0_i32_0 : i32, i32
  }
  func.func @transform_7(%arg0: i32) -> (i32, i32) {
    %c0_i32 = arith.constant 0 : i32
    %c0_i32_0 = arith.constant 0 : i32
    %c0_i32_1 = arith.constant 0 : i32
    return %c0_i32, %c0_i32_0 : i32, i32
  }
  func.func @transform_8(%arg0: i32) -> (i32, i32) {
    %c0_i32 = arith.constant 0 : i32
    %c0_i32_0 = arith.constant 0 : i32
    %c0_i32_1 = arith.constant 0 : i32
    return %c0_i32, %c0_i32_0 : i32, i32
  }
  func.func @transform_9(%arg0: i32) -> (i32, i32) {
    %c0_i32 = arith.constant 0 : i32
    %c0_i32_0 = arith.constant 0 : i32
    %c0_i32_1 = arith.constant 0 : i32
    return %c0_i32, %c0_i32_0 : i32, i32
  }
  func.func @transform_10(%arg0: i32) -> (i32, i32) {
    %c0_i32 = arith.constant 0 : i32
    %c0_i32_0 = arith.constant 0 : i32
    %c0_i32_1 = arith.constant 0 : i32
    return %c0_i32, %c0_i32_0 : i32, i32
  }
  func.func @transform_11(%arg0: i32) -> (i32, i32) {
    %c0_i32 = arith.constant 0 : i32
    %c0_i32_0 = arith.constant 0 : i32
    return %arg0, %c0_i32 : i32, i32
  }
}

</mosaic_0001>

<llo_original>
// kernel: tpu_custom_call.1
$region0: #{tpu_custom_call.1}
  #allocation0 [shape = 'u32[]', space=smem, size = 0x4, offset = 0x4, fixed_abs, tag = 'smem constant byte address 0x4 - core index']
  #allocation1 [shape = 'u32[72,128]{1,0:T(1,128)}', space=vmem, size = 0x9000, scoped, tag = 'internal scratch']
  %s0 = inlined_call_operand.hbm [shape: bf16[8,128], index: 0, kind: input, shape index: {}]
  %s1 = inlined_call_operand.hbm [shape: bf16[128,128], index: 1, kind: input, shape index: {}]
  %s2 = inlined_call_operand.vmem [shape: f32[1,128], index: 2, kind: input, shape index: {}]
  %s3 = inlined_call_operand.hbm [shape: bf16[128,128], index: 3, kind: input, shape index: {}]
  %s4 = inlined_call_operand.vmem [shape: f32[1,128], index: 4, kind: input, shape index: {}]
  %s5 = inlined_call_operand.hbm [shape: bf16[128,128], index: 5, kind: input, shape index: {}]
  %s6 = inlined_call_operand.vmem [shape: f32[1,128], index: 6, kind: input, shape index: {}]
  %s7 = inlined_call_operand.hbm [shape: bf16[128,128], index: 7, kind: input, shape index: {}]
  %s8 = inlined_call_operand.vmem [shape: f32[1,128], index: 8, kind: input, shape index: {}]
  %s9 = inlined_call_operand.hbm [shape: bf16[128,128], index: 9, kind: input, shape index: {}]
  %s10 = inlined_call_operand.vmem [shape: f32[1,128], index: 10, kind: input, shape index: {}]
  %s11 = inlined_call_operand.hbm [shape: bf16[8,128], index: 11, kind: output, shape index: {}]
  %s12 = sld [smem:[#allocation0]]
  $region78: #{tpu_custom_call.1} parent=0
    _
  %s14 = ssub.s32 1, %s12
  %s15 = scalar_select 0, %s14, %s12
  $region1: #{tpu_custom_call.1} parent=0
    #allocation2 [shape = 'u8[2048]{0}', space=vmem, size = 0x800, scoped, tag = 'input window, operand 0, single buffered']
    #allocation3 [shape = 's32[1]{0}', space=sflag, size = 0x4, scoped, tag = 'scoped memory for tpu_custom_call.1']
    #allocation4 [shape = 's32[1]{0}', space=sflag, size = 0x4, scoped, tag = 'scoped memory for tpu_custom_call.1']
    #allocation5 [shape = 'u8[32768]{0}', space=vmem, size = 0x8000, scoped, tag = 'input window, operand 1, single buffered']
    #allocation6 [shape = 's32[1]{0}', space=sflag, size = 0x4, scoped, tag = 'scoped memory for tpu_custom_call.1']
    #allocation7 [shape = 'u8[32768]{0}', space=vmem, size = 0x8000, scoped, tag = 'input window, operand 3, single buffered']
    #allocation8 [shape = 'u8[32768]{0}', space=vmem, size = 0x8000, scoped, tag = 'input window, operand 5, single buffered']
    #allocation9 [shape = 's32[1]{0}', space=sflag, size = 0x4, scoped, tag = 'scoped memory for tpu_custom_call.1']
    #allocation10 [shape = 'u8[32768]{0}', space=vmem, size = 0x8000, scoped, tag = 'input window, operand 7, single buffered']
    #allocation11 [shape = 'u8[32768]{0}', space=vmem, size = 0x8000, scoped, tag = 'input window, operand 9, single buffered']
    #allocation12 [shape = 's32[1]{0}', space=sflag, size = 0x4, scoped, tag = 'scoped memory for tpu_custom_call.1']
    #allocation13 [shape = 'u8[2048]{0}', space=vmem, size = 0x800, scoped, tag = 'output window, operand 0, single buffered']
    %16 = vsyncpa [#allocation3], 0
    %17 = vsyncpa [#allocation6], 0
    %18 = vsyncpa [#allocation9], 0
    %19 = vsyncpa [#allocation12], 0
    %20 = vsyncpa [#allocation4], 0
    // Predicated region
    $region2: #{tpu_custom_call.1} parent=1 // pred_check
      _
    $region3: #{tpu_custom_call.1} parent=1 // pred_check_branch
      %22 = sbr.rel (0) target = $region5
    $region4: #{tpu_custom_call.1} parent=1 // pred_region
      %24 = vsyncadd [#allocation3], 0
      %s26 = sshll.u32 %s0, 4
      %s27 = int_to_ptr.hbm [resolvable:$true] %s26
      %s28 = sshll.u32 [#allocation2], 4
      %s29 = int_to_ptr.vmem [resolvable:$true] %s28
      %31 = dma.hbm_to_vmem [thread:$0]  %s27, 64, %s29, [#allocation3]
    $region5: #{tpu_custom_call.1} parent=1 // pred_fallthru
      _
    // Predicated region
    $region6: #{tpu_custom_call.1} parent=1 // pred_check
      _
    $region7: #{tpu_custom_call.1} parent=1 // pred_check_branch
      %33 = sbr.rel (0) target = $region9
    $region8: #{tpu_custom_call.1} parent=1 // pred_region
      %35 = vsyncadd [#allocation6], 0
      %s36 = sshll.u32 %s1, 4
      %s37 = int_to_ptr.hbm [resolvable:$true] %s36
      %s38 = sshll.u32 [#allocation5], 4
      %s39 = int_to_ptr.vmem [resolvable:$true] %s38
      %44 = dma.hbm_to_vmem [thread:$0]  %s37, 1024, %s39, [#allocation6], 64, 64, 4
    $region9: #{tpu_custom_call.1} parent=1 // pred_fallthru
      _
    // Predicated region
    $region10: #{tpu_custom_call.1} parent=1 // pred_check
      _
    $region11: #{tpu_custom_call.1} parent=1 // pred_check_branch
      %46 = sbr.rel (0) target = $region13
    $region12: #{tpu_custom_call.1} parent=1 // pred_region
      _
    $region13: #{tpu_custom_call.1} parent=1 // pred_fallthru
      _
    // Predicated region
    $region14: #{tpu_custom_call.1} parent=1 // pred_check
      _
    $region15: #{tpu_custom_call.1} parent=1 // pred_check_branch
      %48 = sbr.rel (0) target = $region17
    $region16: #{tpu_custom_call.1} parent=1 // pred_region
      %50 = vsyncadd [#allocation6], 0
      %s51 = sshll.u32 %s3, 4
      %s52 = int_to_ptr.hbm [resolvable:$true] %s51
      %s53 = sshll.u32 [#allocation7], 4
      %s54 = int_to_ptr.vmem [resolvable:$true] %s53
      %59 = dma.hbm_to_vmem [thread:$0]  %s52, 1024, %s54, [#allocation6], 64, 64, 4
    $region17: #{tpu_custom_call.1} parent=1 // pred_fallthru
      _
    // Predicated region
    $region18: #{tpu_custom_call.1} parent=1 // pred_check
      _
    $region19: #{tpu_custom_call.1} parent=1 // pred_check_branch
      %61 = sbr.rel (0) target = $region21
    $region20: #{tpu_custom_call.1} parent=1 // pred_region
      _
    $region21: #{tpu_custom_call.1} parent=1 // pred_fallthru
      _
    // Predicated region
    $region22: #{tpu_custom_call.1} parent=1 // pred_check
      _
    $region23: #{tpu_custom_call.1} parent=1 // pred_check_branch
      %63 = sbr.rel (0) target = $region25
    $region24: #{tpu_custom_call.1} parent=1 // pred_region
      %65 = vsyncadd [#allocation9], 0
      %s66 = sshll.u32 %s5, 4
      %s67 = int_to_ptr.hbm [resolvable:$true] %s66
      %s68 = sshll.u32 [#allocation8], 4
      %s69 = int_to_ptr.vmem [resolvable:$true] %s68
      %74 = dma.hbm_to_vmem [thread:$0]  %s67, 1024, %s69, [#allocation9], 64, 64, 4
    $region25: #{tpu_custom_call.1} parent=1 // pred_fallthru
      _
    // Predicated region
    $region26: #{tpu_custom_call.1} parent=1 // pred_check
      _
    $region27: #{tpu_custom_call.1} parent=1 // pred_check_branch
      %76 = sbr.rel (0) target = $region29
    $region28: #{tpu_custom_call.1} parent=1 // pred_region
      _
    $region29: #{tpu_custom_call.1} parent=1 // pred_fallthru
      _
    // Predicated region
    $region30: #{tpu_custom_call.1} parent=1 // pred_check
      _
    $region31: #{tpu_custom_call.1} parent=1 // pred_check_branch
      %78 = sbr.rel (0) target = $region33
    $region32: #{tpu_custom_call.1} parent=1 // pred_region
      %80 = vsyncadd [#allocation9], 0
      %s81 = sshll.u32 %s7, 4
      %s82 = int_to_ptr.hbm [resolvable:$true] %s81
      %s83 = sshll.u32 [#allocation10], 4
      %s84 = int_to_ptr.vmem [resolvable:$true] %s83
      %89 = dma.hbm_to_vmem [thread:$0]  %s82, 1024, %s84, [#allocation9], 64, 64, 4
    $region33: #{tpu_custom_call.1} parent=1 // pred_fallthru
      _
    // Predicated region
    $region34: #{tpu_custom_call.1} parent=1 // pred_check
      _
    $region35: #{tpu_custom_call.1} parent=1 // pred_check_branch
      %91 = sbr.rel (0) target = $region37
    $region36: #{tpu_custom_call.1} parent=1 // pred_region
      _
    $region37: #{tpu_custom_call.1} parent=1 // pred_fallthru
      _
    // Predicated region
    $region38: #{tpu_custom_call.1} parent=1 // pred_check
      _
    $region39: #{tpu_custom_call.1} parent=1 // pred_check_branch
      %93 = sbr.rel (0) target = $region41
    $region40: #{tpu_custom_call.1} parent=1 // pred_region
      %95 = vsyncadd [#allocation12], 0
      %s96 = sshll.u32 %s9, 4
      %s97 = int_to_ptr.hbm [resolvable:$true] %s96
      %s98 = sshll.u32 [#allocation11], 4
      %s99 = int_to_ptr.vmem [resolvable:$true] %s98
      %104 = dma.hbm_to_vmem [thread:$0]  %s97, 1024, %s99, [#allocation12], 64, 64, 4
    $region41: #{tpu_custom_call.1} parent=1 // pred_fallthru
      _
    // Predicated region
    $region42: #{tpu_custom_call.1} parent=1 // pred_check
      _
    $region43: #{tpu_custom_call.1} parent=1 // pred_check_branch
      %106 = sbr.rel (0) target = $region45
    $region44: #{tpu_custom_call.1} parent=1 // pred_region
      _
    $region45: #{tpu_custom_call.1} parent=1 // pred_fallthru
      _
    // Predicated region
    $region46: #{tpu_custom_call.1} parent=1 // pred_check
      _
    $region47: #{tpu_custom_call.1} parent=1 // pred_check_branch
      %108 = sbr.rel (0) target = $region49
    $region48: #{tpu_custom_call.1} parent=1 // pred_region
      %110 = dma.done [#allocation3], 64
    $region49: #{tpu_custom_call.1} parent=1 // pred_fallthru
      _
    // Predicated region
    $region50: #{tpu_custom_call.1} parent=1 // pred_check
      _
    $region51: #{tpu_custom_call.1} parent=1 // pred_check_branch
      %112 = sbr.rel (0) target = $region53
    $region52: #{tpu_custom_call.1} parent=1 // pred_region
      %114 = dma.done [#allocation6], 1024
    $region53: #{tpu_custom_call.1} parent=1 // pred_fallthru
      _
    // Predicated region
    $region54: #{tpu_custom_call.1} parent=1 // pred_check
      _
    $region55: #{tpu_custom_call.1} parent=1 // pred_check_branch
      %116 = sbr.rel (0) target = $region57
    $region56: #{tpu_custom_call.1} parent=1 // pred_region
      %118 = dma.done [#allocation6], 1024
    $region57: #{tpu_custom_call.1} parent=1 // pred_fallthru
      _
    // Predicated region
    $region58: #{tpu_custom_call.1} parent=1 // pred_check
      _
    $region59: #{tpu_custom_call.1} parent=1 // pred_check_branch
      %120 = sbr.rel (0) target = $region61
    $region60: #{tpu_custom_call.1} parent=1 // pred_region
      %122 = dma.done [#allocation9], 1024
    $region61: #{tpu_custom_call.1} parent=1 // pred_fallthru
      _
    // Predicated region
    $region62: #{tpu_custom_call.1} parent=1 // pred_check
      _
    $region63: #{tpu_custom_call.1} parent=1 // pred_check_branch
      %124 = sbr.rel (0) target = $region65
    $region64: #{tpu_custom_call.1} parent=1 // pred_region
      %126 = dma.done [#allocation9], 1024
    $region65: #{tpu_custom_call.1} parent=1 // pred_fallthru
      _
    // Predicated region
    $region66: #{tpu_custom_call.1} parent=1 // pred_check
      _
    $region67: #{tpu_custom_call.1} parent=1 // pred_check_branch
      %128 = sbr.rel (0) target = $region69
    $region68: #{tpu_custom_call.1} parent=1 // pred_region
      %130 = dma.done [#allocation12], 1024
    $region69: #{tpu_custom_call.1} parent=1 // pred_fallthru
      _
    %v131 = vld [vmem:[#allocation2] sm:$0xf]
    %v132 = vld [vmem:[#allocation5] sm:$0xf]
    %v133 = vld [vmem:[#allocation5 + $0x4] sm:$0xf]
    %v134 = vld [vmem:[#allocation5 + $0x8] sm:$0xf]
    %v135 = vld [vmem:[#allocation5 + $0xc] sm:$0xf]
    %v136 = vld [vmem:[#allocation5 + $0x10] sm:$0xf]
    %v137 = vld [vmem:[#allocation5 + $0x14] sm:$0xf]
    %v138 = vld [vmem:[#allocation5 + $0x18] sm:$0xf]
    %v139 = vld [vmem:[#allocation5 + $0x1c] sm:$0xf]
    %v140 = vld [vmem:[#allocation5 + $0x20] sm:$0xf]
    %v141 = vld [vmem:[#allocation5 + $0x24] sm:$0xf]
    %v142 = vld [vmem:[#allocation5 + $0x28] sm:$0xf]
    %v143 = vld [vmem:[#allocation5 + $0x2c] sm:$0xf]
    %v144 = vld [vmem:[#allocation5 + $0x30] sm:$0xf]
    %v145 = vld [vmem:[#allocation5 + $0x34] sm:$0xf]
    %v146 = vld [vmem:[#allocation5 + $0x38] sm:$0xf]
    %v147 = vld [vmem:[#allocation5 + $0x3c] sm:$0xf]
    %v148 = vld [vmem:[%s2] sm:$0x1]
    %v150 = vperm.slane %v148, 0
    %v168 = vunpack.c.l.b16 %v132
    %v169 = vunpack.c.l.b16 %v133
    %v170 = vunpack.c.l.b16 %v134
    %v171 = vunpack.c.l.b16 %v135
    %v172 = vunpack.c.l.b16 %v136
    %v173 = vunpack.c.l.b16 %v137
    %v174 = vunpack.c.l.b16 %v138
    %v175 = vunpack.c.l.b16 %v139
    %v176 = vunpack.c.l.b16 %v140
    %v177 = vunpack.c.l.b16 %v141
    %v178 = vunpack.c.l.b16 %v142
    %v179 = vunpack.c.l.b16 %v143
    %v180 = vunpack.c.l.b16 %v144
    %v181 = vunpack.c.l.b16 %v145
    %v182 = vunpack.c.l.b16 %v146
    %v183 = vunpack.c.l.b16 %v147
    %v184 = vpack.c.b16 %v169, %v168
    %v185 = vpack.c.b16 %v171, %v170
    %v186 = vpack.c.b16 %v173, %v172
    %v187 = vpack.c.b16 %v175, %v174
    %v188 = vpack.c.b16 %v177, %v176
    %v189 = vpack.c.b16 %v179, %v178
    %v190 = vpack.c.b16 %v181, %v180
    %v191 = vpack.c.b16 %v183, %v182
    %200 = vmatpush.bf16.msra.mxu0 %v191
    %201 = vmatpush.bf16.msra.mxu0 %v190
    %202 = vmatpush.bf16.msra.mxu0 %v189
    %203 = vmatpush.bf16.msra.mxu0 %v188
    %204 = vmatpush.bf16.msra.mxu0 %v187
    %205 = vmatpush.bf16.msra.mxu0 %v186
    %206 = vmatpush.bf16.msra.mxu0 %v185
    %207 = vmatpush.bf16.msra.mxu0 %v184
    %208 = vmatmul.bf16.gmra.mxu0 %v131
    %v209 = vpop.f32.mrf.mxu0
    %v210 = vadd.f32 %v150, %v209
    %v211 = vpop.f32.mrf.mxu0
    %212 = vdwg.mxu0
    %v213 = vmax.f32 %v210, 0.0
    %v214 = vpack.c.bf16 %v213, %v213
    %v215 = vld [vmem:[#allocation7] sm:$0xf]
    %v216 = vld [vmem:[#allocation7 + $0x4] sm:$0xf]
    %v217 = vld [vmem:[#allocation7 + $0x8] sm:$0xf]
    %v218 = vld [vmem:[#allocation7 + $0xc] sm:$0xf]
    %v219 = vld [vmem:[#allocation7 + $0x10] sm:$0xf]
    %v220 = vld [vmem:[#allocation7 + $0x14] sm:$0xf]
    %v221 = vld [vmem:[#allocation7 + $0x18] sm:$0xf]
    %v222 = vld [vmem:[#allocation7 + $0x1c] sm:$0xf]
    %v223 = vld [vmem:[#allocation7 + $0x20] sm:$0xf]
    %v224 = vld [vmem:[#allocation7 + $0x24] sm:$0xf]
    %v225 = vld [vmem:[#allocation7 + $0x28] sm:$0xf]
    %v226 = vld [vmem:[#allocation7 + $0x2c] sm:$0xf]
    %v227 = vld [vmem:[#allocation7 + $0x30] sm:$0xf]
    %v228 = vld [vmem:[#allocation7 + $0x34] sm:$0xf]
    %v229 = vld [vmem:[#allocation7 + $0x38] sm:$0xf]
    %v230 = vld [vmem:[#allocation7 + $0x3c] sm:$0xf]
    %v231 = vld [vmem:[%s4] sm:$0x1]
    %v233 = vperm.slane %v231, 0
    %v251 = vunpack.c.l.b16 %v215
    %v252 = vunpack.c.l.b16 %v216
    %v253 = vunpack.c.l.b16 %v217
    %v254 = vunpack.c.l.b16 %v218
    %v255 = vunpack.c.l.b16 %v219
    %v256 = vunpack.c.l.b16 %v220
    %v257 = vunpack.c.l.b16 %v221
    %v258 = vunpack.c.l.b16 %v222
    %v259 = vunpack.c.l.b16 %v223
    %v260 = vunpack.c.l.b16 %v224
    %v261 = vunpack.c.l.b16 %v225
    %v262 = vunpack.c.l.b16 %v226
    %v263 = vunpack.c.l.b16 %v227
    %v264 = vunpack.c.l.b16 %v228
    %v265 = vunpack.c.l.b16 %v229
    %v266 = vunpack.c.l.b16 %v230
    %v267 = vpack.c.b16 %v252, %v251
    %v268 = vpack.c.b16 %v254, %v253
    %v269 = vpack.c.b16 %v256, %v255
    %v270 = vpack.c.b16 %v258, %v257
    %v271 = vpack.c.b16 %v260, %v259
    %v272 = vpack.c.b16 %v262, %v261
    %v273 = vpack.c.b16 %v264, %v263
    %v274 = vpack.c.b16 %v266, %v265
    %283 = vmatpush.bf16.msra.mxu0 %v274
    %284 = vmatpush.bf16.msra.mxu0 %v273
    %285 = vmatpush.bf16.msra.mxu0 %v272
    %286 = vmatpush.bf16.msra.mxu0 %v271
    %287 = vmatpush.bf16.msra.mxu0 %v270
    %288 = vmatpush.bf16.msra.mxu0 %v269
    %289 = vmatpush.bf16.msra.mxu0 %v268
    %290 = vmatpush.bf16.msra.mxu0 %v267
    %291 = vmatmul.bf16.gmra.mxu0 %v214
    %v292 = vpop.f32.mrf.mxu0
    %v293 = vadd.f32 %v233, %v292
    %v294 = vpop.f32.mrf.mxu0
    %295 = vdwg.mxu0
    %v296 = vmax.f32 %v293, 0.0
    %v297 = vpack.c.bf16 %v296, %v296
    %v298 = vld [vmem:[#allocation8] sm:$0xf]
    %v299 = vld [vmem:[#allocation8 + $0x4] sm:$0xf]
    %v300 = vld [vmem:[#allocation8 + $0x8] sm:$0xf]
    %v301 = vld [vmem:[#allocation8 + $0xc] sm:$0xf]
    %v302 = vld [vmem:[#allocation8 + $0x10] sm:$0xf]
    %v303 = vld [vmem:[#allocation8 + $0x14] sm:$0xf]
    %v304 = vld [vmem:[#allocation8 + $0x18] sm:$0xf]
    %v305 = vld [vmem:[#allocation8 + $0x1c] sm:$0xf]
    %v306 = vld [vmem:[#allocation8 + $0x20] sm:$0xf]
    %v307 = vld [vmem:[#allocation8 + $0x24] sm:$0xf]
    %v308 = vld [vmem:[#allocation8 + $0x28] sm:$0xf]
    %v309 = vld [vmem:[#allocation8 + $0x2c] sm:$0xf]
    %v310 = vld [vmem:[#allocation8 + $0x30] sm:$0xf]
    %v311 = vld [vmem:[#allocation8 + $0x34] sm:$0xf]
    %v312 = vld [vmem:[#allocation8 + $0x38] sm:$0xf]
    %v313 = vld [vmem:[#allocation8 + $0x3c] sm:$0xf]
    %v314 = vld [vmem:[%s6] sm:$0x1]
    %v316 = vperm.slane %v314, 0
    %v334 = vunpack.c.l.b16 %v298
    %v335 = vunpack.c.l.b16 %v299
    %v336 = vunpack.c.l.b16 %v300
    %v337 = vunpack.c.l.b16 %v301
    %v338 = vunpack.c.l.b16 %v302
    %v339 = vunpack.c.l.b16 %v303
    %v340 = vunpack.c.l.b16 %v304
    %v341 = vunpack.c.l.b16 %v305
    %v342 = vunpack.c.l.b16 %v306
    %v343 = vunpack.c.l.b16 %v307
    %v344 = vunpack.c.l.b16 %v308
    %v345 = vunpack.c.l.b16 %v309
    %v346 = vunpack.c.l.b16 %v310
    %v347 = vunpack.c.l.b16 %v311
    %v348 = vunpack.c.l.b16 %v312
    %v349 = vunpack.c.l.b16 %v313
    %v350 = vpack.c.b16 %v335, %v334
    %v351 = vpack.c.b16 %v337, %v336
    %v352 = vpack.c.b16 %v339, %v338
    %v353 = vpack.c.b16 %v341, %v340
    %v354 = vpack.c.b16 %v343, %v342
    %v355 = vpack.c.b16 %v345, %v344
    %v356 = vpack.c.b16 %v347, %v346
    %v357 = vpack.c.b16 %v349, %v348
    %366 = vmatpush.bf16.msra.mxu0 %v357
    %367 = vmatpush.bf16.msra.mxu0 %v356
    %368 = vmatpush.bf16.msra.mxu0 %v355
    %369 = vmatpush.bf16.msra.mxu0 %v354
    %370 = vmatpush.bf16.msra.mxu0 %v353
    %371 = vmatpush.bf16.msra.mxu0 %v352
    %372 = vmatpush.bf16.msra.mxu0 %v351
    %373 = vmatpush.bf16.msra.mxu0 %v350
    %374 = vmatmul.bf16.gmra.mxu0 %v297
    %v375 = vpop.f32.mrf.mxu0
    %v376 = vadd.f32 %v316, %v375
    %v377 = vpop.f32.mrf.mxu0
    %378 = vdwg.mxu0
    %v379 = vmax.f32 %v376, 0.0
    %v380 = vpack.c.bf16 %v379, %v379
    %v381 = vld [vmem:[#allocation10] sm:$0xf]
    %v382 = vld [vmem:[#allocation10 + $0x4] sm:$0xf]
    %v383 = vld [vmem:[#allocation10 + $0x8] sm:$0xf]
    %v384 = vld [vmem:[#allocation10 + $0xc] sm:$0xf]
    %v385 = vld [vmem:[#allocation10 + $0x10] sm:$0xf]
    %v386 = vld [vmem:[#allocation10 + $0x14] sm:$0xf]
    %v387 = vld [vmem:[#allocation10 + $0x18] sm:$0xf]
    %v388 = vld [vmem:[#allocation10 + $0x1c] sm:$0xf]
    %v389 = vld [vmem:[#allocation10 + $0x20] sm:$0xf]
    %v390 = vld [vmem:[#allocation10 + $0x24] sm:$0xf]
    %v391 = vld [vmem:[#allocation10 + $0x28] sm:$0xf]
    %v392 = vld [vmem:[#allocation10 + $0x2c] sm:$0xf]
    %v393 = vld [vmem:[#allocation10 + $0x30] sm:$0xf]
    %v394 = vld [vmem:[#allocation10 + $0x34] sm:$0xf]
    %v395 = vld [vmem:[#allocation10 + $0x38] sm:$0xf]
    %v396 = vld [vmem:[#allocation10 + $0x3c] sm:$0xf]
    %v397 = vld [vmem:[%s8] sm:$0x1]
    %v399 = vperm.slane %v397, 0
    %v417 = vunpack.c.l.b16 %v381
    %v418 = vunpack.c.l.b16 %v382
    %v419 = vunpack.c.l.b16 %v383
    %v420 = vunpack.c.l.b16 %v384
    %v421 = vunpack.c.l.b16 %v385
    %v422 = vunpack.c.l.b16 %v386
    %v423 = vunpack.c.l.b16 %v387
    %v424 = vunpack.c.l.b16 %v388
    %v425 = vunpack.c.l.b16 %v389
    %v426 = vunpack.c.l.b16 %v390
    %v427 = vunpack.c.l.b16 %v391
    %v428 = vunpack.c.l.b16 %v392
    %v429 = vunpack.c.l.b16 %v393
    %v430 = vunpack.c.l.b16 %v394
    %v431 = vunpack.c.l.b16 %v395
    %v432 = vunpack.c.l.b16 %v396
    %v433 = vpack.c.b16 %v418, %v417
    %v434 = vpack.c.b16 %v420, %v419
    %v435 = vpack.c.b16 %v422, %v421
    %v436 = vpack.c.b16 %v424, %v423
    %v437 = vpack.c.b16 %v426, %v425
    %v438 = vpack.c.b16 %v428, %v427
    %v439 = vpack.c.b16 %v430, %v429
    %v440 = vpack.c.b16 %v432, %v431
    %449 = vmatpush.bf16.msra.mxu0 %v440
    %450 = vmatpush.bf16.msra.mxu0 %v439
    %451 = vmatpush.bf16.msra.mxu0 %v438
    %452 = vmatpush.bf16.msra.mxu0 %v437
    %453 = vmatpush.bf16.msra.mxu0 %v436
    %454 = vmatpush.bf16.msra.mxu0 %v435
    %455 = vmatpush.bf16.msra.mxu0 %v434
    %456 = vmatpush.bf16.msra.mxu0 %v433
    %457 = vmatmul.bf16.gmra.mxu0 %v380
    %v458 = vpop.f32.mrf.mxu0
    %v459 = vadd.f32 %v399, %v458
    %v460 = vpop.f32.mrf.mxu0
    %461 = vdwg.mxu0
    %v462 = vmax.f32 %v459, 0.0
    %v463 = vpack.c.bf16 %v462, %v462
    %v464 = vld [vmem:[#allocation11] sm:$0xf]
    %v465 = vld [vmem:[#allocation11 + $0x4] sm:$0xf]
    %v466 = vld [vmem:[#allocation11 + $0x8] sm:$0xf]
    %v467 = vld [vmem:[#allocation11 + $0xc] sm:$0xf]
    %v468 = vld [vmem:[#allocation11 + $0x10] sm:$0xf]
    %v469 = vld [vmem:[#allocation11 + $0x14] sm:$0xf]
    %v470 = vld [vmem:[#allocation11 + $0x18] sm:$0xf]
    %v471 = vld [vmem:[#allocation11 + $0x1c] sm:$0xf]
    %v472 = vld [vmem:[#allocation11 + $0x20] sm:$0xf]
    %v473 = vld [vmem:[#allocation11 + $0x24] sm:$0xf]
    %v474 = vld [vmem:[#allocation11 + $0x28] sm:$0xf]
    %v475 = vld [vmem:[#allocation11 + $0x2c] sm:$0xf]
    %v476 = vld [vmem:[#allocation11 + $0x30] sm:$0xf]
    %v477 = vld [vmem:[#allocation11 + $0x34] sm:$0xf]
    %v478 = vld [vmem:[#allocation11 + $0x38] sm:$0xf]
    %v479 = vld [vmem:[#allocation11 + $0x3c] sm:$0xf]
    %v480 = vld [vmem:[%s10] sm:$0x1]
    %v482 = vperm.slane %v480, 0
    %v500 = vunpack.c.l.b16 %v464
    %v501 = vunpack.c.l.b16 %v465
    %v502 = vunpack.c.l.b16 %v466
    %v503 = vunpack.c.l.b16 %v467
    %v504 = vunpack.c.l.b16 %v468
    %v505 = vunpack.c.l.b16 %v469
    %v506 = vunpack.c.l.b16 %v470
    %v507 = vunpack.c.l.b16 %v471
    %v508 = vunpack.c.l.b16 %v472
    %v509 = vunpack.c.l.b16 %v473
    %v510 = vunpack.c.l.b16 %v474
    %v511 = vunpack.c.l.b16 %v475
    %v512 = vunpack.c.l.b16 %v476
    %v513 = vunpack.c.l.b16 %v477
    %v514 = vunpack.c.l.b16 %v478
    %v515 = vunpack.c.l.b16 %v479
    %v516 = vpack.c.b16 %v501, %v500
    %v517 = vpack.c.b16 %v503, %v502
    %v518 = vpack.c.b16 %v505, %v504
    %v519 = vpack.c.b16 %v507, %v506
    %v520 = vpack.c.b16 %v509, %v508
    %v521 = vpack.c.b16 %v511, %v510
    %v522 = vpack.c.b16 %v513, %v512
    %v523 = vpack.c.b16 %v515, %v514
    %532 = vmatpush.bf16.msra.mxu0 %v523
    %533 = vmatpush.bf16.msra.mxu0 %v522
    %534 = vmatpush.bf16.msra.mxu0 %v521
    %535 = vmatpush.bf16.msra.mxu0 %v520
    %536 = vmatpush.bf16.msra.mxu0 %v519
    %537 = vmatpush.bf16.msra.mxu0 %v518
    %538 = vmatpush.bf16.msra.mxu0 %v517
    %539 = vmatpush.bf16.msra.mxu0 %v516
    %540 = vmatmul.bf16.gmra.mxu0 %v463
    %v541 = vpop.f32.mrf.mxu0
    %v542 = vadd.f32 %v482, %v541
    %v543 = vpop.f32.mrf.mxu0
    %544 = vdwg.mxu0
    %v545 = vpack.c.bf16 %v542, %v542
    %546 = vst [vmem:[#allocation13] sm:$0xf] %v545
    // Predicated region
    $region70: #{tpu_custom_call.1} parent=1 // pred_check
      _
    $region71: #{tpu_custom_call.1} parent=1 // pred_check_branch
      %548 = sbr.rel (0) target = $region73
    $region72: #{tpu_custom_call.1} parent=1 // pred_region
      %550 = vsyncadd [#allocation4], 0
      %s552 = sshll.u32 [#allocation13], 4
      %s553 = int_to_ptr.vmem [resolvable:$true] %s552
      %s554 = sshll.u32 %s11, 4
      %s555 = int_to_ptr.hbm [resolvable:$true] %s554
      %557 = dma.vmem_to_hbm [thread:$0]  %s553, 64, %s555, [#allocation4]
    $region73: #{tpu_custom_call.1} parent=1 // pred_fallthru
      _
    // Predicated region
    $region74: #{tpu_custom_call.1} parent=1 // pred_check
      _
    $region75: #{tpu_custom_call.1} parent=1 // pred_check_branch
      %559 = sbr.rel (0) target = $region77
    $region76: #{tpu_custom_call.1} parent=1 // pred_region
      %561 = dma.done [#allocation4], 64
    $region77: #{tpu_custom_call.1} parent=1 // pred_fallthru
      _
    %562 = vsyncpa [#allocation3], 1
    %563 = vsyncpa [#allocation6], 1
    %564 = vsyncpa [#allocation9], 1
    %565 = vsyncpa [#allocation12], 1
    %566 = vsyncpa [#allocation4], 1

</llo_original>
